<compile_context>
chip_gen: v7x
topology: tpu7x:2x2x1
jax: 0.10.0
libtpu: 0.0.40
codegen_flags: <defaults>
</compile_context>

<pallas_src>
import jax
import jax.numpy as jnp
import numpy as np
from jax.experimental import pallas as pl
from jax.experimental.pallas import tpu as pltpu

GRID_SIZE = 5
SPLINE_ORDER = 3
GRID_RANGE = (-1.0, 1.0)
N_BASES = GRID_SIZE + SPLINE_ORDER            # 8 spline bases per input feature
N_KNOTS = GRID_SIZE + 2 * SPLINE_ORDER + 1    # 12 grid knots
N_TERMS = N_BASES + 1                         # SiLU term + 8 basis terms (fused K blocks)
_H = (GRID_RANGE[1] - GRID_RANGE[0]) / GRID_SIZE
_BASIS_SCALE = 1.0                            # folded into weights (see below)
for _k in range(1, SPLINE_ORDER + 1):
    _BASIS_SCALE *= _k * _H                   # = 6 * h^3 for order 3


def _grid_knots():
    # torch.arange(-spline_order, grid_size + spline_order + 1) * h + grid_range[0]
    return [GRID_RANGE[0] + _H * (j - SPLINE_ORDER) for j in range(N_KNOTS)]


def _round_up(v, m):
    return ((v + m - 1) // m) * m


def kan_kernel(x_ref, w_ref, o_ref):
    """x_ref: (tm, in_p); w_ref: (N_TERMS*in_p, out_p); o_ref: (tm, out_p)."""
    x = x_ref[...].astype(jnp.float32)               # basis recursion always in f32
    g = _grid_knots()                                # python float constants

    # 12 step functions -> 11 half-open-interval indicators (step_j - step_{j+1}):
    # indicator of [g_j, g_{j+1}), exactly matching (x >= g_j) & (x < g_{j+1}).
    steps = [(x >= g[j]).astype(jnp.float32) for j in range(N_KNOTS)]
    bases = [steps[j] - steps[j + 1] for j in range(N_KNOTS - 1)]

    # Hoist (x - g[j]) once and reuse across all recursion levels (independent subs
    # so the VLIW scheduler can co-issue them).
    t = [x - g[j] for j in range(N_KNOTS)]

    # Unnormalized Cox–de Boor recursion, fully unrolled (pure VPU elementwise).
    # Uniform grid => every level's denominator is the constant k*h; the product
    # 6*h^3 is folded into the spline weight rows in the wrapper, so no divides or
    # per-level scale multiplies are emitted here.
    for k in range(1, SPLINE_ORDER + 1):
        bases = [t[j] * bases[j] - t[j + k + 1] * bases[j + 1]
                 for j in range(len(bases) - 1)]      # len == N_BASES at the end

    silu = x * jax.nn.sigmoid(x)                      # EUP sigmoid + VPU mul

    # Single fused MXU matmul: (tm, 9*in_p) @ (9*in_p, out_p), f32 accumulate.
    act = jnp.concatenate([silu] + bases, axis=-1)
    o_ref[...] = jnp.dot(act, w_ref[...],
                         preferred_element_type=jnp.float32).astype(o_ref.dtype)


def kan_efficient_forward(x, base_weight, spline_weight, spline_scaler, *, tm=256):
    """x: (B, S, in_f); base_weight: (out, in); spline_weight: (out, in, n_bases);
    spline_scaler: (out, in). Returns (B, S, out)."""
    B, S, in_f = x.shape
    out_f = base_weight.shape[0]
    N = B * S

    # Lane-dense padding (multiples of 128) for both feature axes.
    in_p = _round_up(in_f, 128)
    out_p = _round_up(out_f, 128)

    # Cap tm so the ~60 live (tm, in_p) f32 basis intermediates stay well inside VMEM
    # (keeps the kernel safe on v5e's 16 MiB scoped default and v7x's 64 MiB VMEM).
    cap = max(8, (24 * 1024 * 1024) // (64 * in_p * 4))
    tm = min(tm, cap, _round_up(N, 8))
    tm = max(8, (tm // 8) * 8)

    n_grid = pl.cdiv(N, tm)
    N_p = n_grid * tm

    xf = x.reshape(N, in_f).astype(jnp.float32)
    xf = jnp.pad(xf, ((0, N_p - N), (0, in_p - in_f)))

    # Fused weight matrix, row-blocks ordered [base | basis 0 | ... | basis 7] to
    # match the lane-axis concat order inside the kernel. The spline rows absorb the
    # constant 1/(6 h^3) normalization dropped from the in-kernel recursion. Padded
    # rows/cols are zero, so padded input features / output lanes contribute nothing.
    scaled = (spline_weight * spline_scaler[:, :, None]).astype(jnp.float32)  # (out,in,nb)
    spline_t = jnp.transpose(scaled, (2, 1, 0)) * (1.0 / _BASIS_SCALE)        # (nb,in,out)
    w = jnp.zeros((N_TERMS, in_p, out_p), jnp.float32)
    w = w.at[0, :in_f, :out_f].set(base_weight.T.astype(jnp.float32))
    w = w.at[1:, :in_f, :out_f].set(spline_t)
    w_fused = w.reshape(N_TERMS * in_p, out_p)

    cost = pl.CostEstimate(
        flops=2 * N_p * (N_TERMS * in_p) * out_p,
        transcendentals=N_p * in_p,
        bytes_accessed=4 * (N_p * in_p + N_TERMS * in_p * out_p + N_p * out_p),
    )

    out = pl.pallas_call(
        kan_kernel,
        out_shape=jax.ShapeDtypeStruct((N_p, out_p), x.dtype),
        grid_spec=pltpu.PrefetchScalarGridSpec(
            num_scalar_prefetch=0,
            grid=(n_grid,),
            in_specs=[
                pl.BlockSpec((tm, in_p), lambda i: (i, 0)),
                # Same block every step -> stays VMEM-resident (no re-DMA).
                pl.BlockSpec((N_TERMS * in_p, out_p), lambda i: (0, 0)),
            ],
            out_specs=pl.BlockSpec((tm, out_p), lambda i: (i, 0)),
        ),
        compiler_params=pltpu.CompilerParams(dimension_semantics=("parallel",)),
        cost_estimate=cost,
    )(xf, w_fused)

    return out[:N, :out_f].reshape(B, S, out_f)


# ---------- pure-JAX reference (mirrors efficient-kan PyTorch code) ----------
def _b_splines_ref(x2d):
    g = jnp.asarray(_grid_knots(), dtype=x2d.dtype)                  # (12,)
    xe = x2d[:, :, None]                                             # (N, in, 1)
    bases = ((xe >= g[:-1]) & (xe < g[1:])).astype(x2d.dtype)         # (N, in, 11)
    for k in range(1, SPLINE_ORDER + 1):
        bases = (
            (xe - g[: -(k + 1)]) / (g[k:-1] - g[: -(k + 1)]) * bases[:, :, :-1]
            + (g[k + 1:] - xe) / (g[k + 1:] - g[1:-k]) * bases[:, :, 1:]
        )
    return bases                                                      # (N, in, 8)


def kan_efficient_ref(x, base_weight, spline_weight, spline_scaler):
    B, S, in_f = x.shape
    out_f = base_weight.shape[0]
    xf = x.reshape(-1, in_f)
    base_out = jax.nn.silu(xf) @ base_weight.T
    scaled = spline_weight * spline_scaler[:, :, None]
    spline_out = _b_splines_ref(xf).reshape(xf.shape[0], -1) @ scaled.reshape(out_f, -1).T
    return (base_out + spline_out).reshape(B, S, out_f)


if __name__ == "__main__":
    B, S, IN_F, OUT_F = 2, 8, 32, 32

    key = jax.random.PRNGKey(0)
    kx, kb, ks, kc = jax.random.split(key, 4)

    # Deterministic synthetic parameters (shapes from EfficientKANLinear.__init__).
    x = jax.random.uniform(kx, (B, S, IN_F), jnp.float32, minval=-1.0, maxval=1.0)
    base_weight = 0.3 * jax.random.normal(kb, (OUT_F, IN_F), jnp.float32)
    spline_weight = 0.1 * jax.random.normal(ks, (OUT_F, IN_F, N_BASES), jnp.float32)
    spline_scaler = 1.0 + 0.1 * jax.random.normal(kc, (OUT_F, IN_F), jnp.float32)

    y = kan_efficient_forward(x, base_weight, spline_weight, spline_scaler)
    y = jax.block_until_ready(y)

    y_ref = kan_efficient_ref(x, base_weight, spline_weight, spline_scaler)
    np.testing.assert_allclose(np.asarray(y), np.asarray(y_ref), rtol=1e-5, atol=1e-5)
    assert y.shape == (B, S, OUT_F)

    print("KERNEL_OK")
</pallas_src>

<mosaic_0001>
module attributes {stable_mosaic.version = 11 : i64} {
  func.func @kan_kernel(%arg0: i32, %arg1: memref<16x128xf32, #tpu.memory_space<vmem>>, %arg2: memref<1152x128xf32, #tpu.memory_space<vmem>>, %arg3: memref<16x128xf32, #tpu.memory_space<vmem>>) attributes {dimension_semantics = [#tpu.dimension_semantics<parallel>], iteration_bounds = array<i64: 1>, scalar_prefetch = 0 : i64, scratch_operands = 0 : i64, tpu.core_type = #tpu.core_type<tc>, window_params = [{transform_indices = @transform_0, window_bounds = array<i64: 16, 128>}, {pipeline_mode = #tpu.pipeline_mode<synchronous>, transform_indices = @transform_1, window_bounds = array<i64: 1152, 128>}, {transform_indices = @transform_2, window_bounds = array<i64: 16, 128>}]} {
    %c0 = arith.constant 0 : index
    %c0_0 = arith.constant 0 : index
    %0 = vector.load %arg1[%c0, %c0_0] : memref<16x128xf32, #tpu.memory_space<vmem>>, vector<16x128xf32>
    %cst = arith.constant -2.200000e+00 : f32
    %1 = vector.broadcast %cst : f32 to vector<16x128xf32>
    %2 = arith.cmpf oge, %0, %1 : vector<16x128xf32>
    %3 = arith.extui %2 : vector<16x128xi1> to vector<16x128xi32>
    %4 = arith.sitofp %3 : vector<16x128xi32> to vector<16x128xf32>
    %cst_1 = arith.constant -1.800000e+00 : f32
    %5 = vector.broadcast %cst_1 : f32 to vector<16x128xf32>
    %6 = arith.cmpf oge, %0, %5 : vector<16x128xf32>
    %7 = arith.extui %6 : vector<16x128xi1> to vector<16x128xi32>
    %8 = arith.sitofp %7 : vector<16x128xi32> to vector<16x128xf32>
    %cst_2 = arith.constant -1.400000e+00 : f32
    %9 = vector.broadcast %cst_2 : f32 to vector<16x128xf32>
    %10 = arith.cmpf oge, %0, %9 : vector<16x128xf32>
    %11 = arith.extui %10 : vector<16x128xi1> to vector<16x128xi32>
    %12 = arith.sitofp %11 : vector<16x128xi32> to vector<16x128xf32>
    %cst_3 = arith.constant -1.000000e+00 : f32
    %13 = vector.broadcast %cst_3 : f32 to vector<16x128xf32>
    %14 = arith.cmpf oge, %0, %13 : vector<16x128xf32>
    %15 = arith.extui %14 : vector<16x128xi1> to vector<16x128xi32>
    %16 = arith.sitofp %15 : vector<16x128xi32> to vector<16x128xf32>
    %cst_4 = arith.constant -6.000000e-01 : f32
    %17 = vector.broadcast %cst_4 : f32 to vector<16x128xf32>
    %18 = arith.cmpf oge, %0, %17 : vector<16x128xf32>
    %19 = arith.extui %18 : vector<16x128xi1> to vector<16x128xi32>
    %20 = arith.sitofp %19 : vector<16x128xi32> to vector<16x128xf32>
    %cst_5 = arith.constant -2.000000e-01 : f32
    %21 = vector.broadcast %cst_5 : f32 to vector<16x128xf32>
    %22 = arith.cmpf oge, %0, %21 : vector<16x128xf32>
    %23 = arith.extui %22 : vector<16x128xi1> to vector<16x128xi32>
    %24 = arith.sitofp %23 : vector<16x128xi32> to vector<16x128xf32>
    %cst_6 = arith.constant 2.000000e-01 : f32
    %25 = vector.broadcast %cst_6 : f32 to vector<16x128xf32>
    %26 = arith.cmpf oge, %0, %25 : vector<16x128xf32>
    %27 = arith.extui %26 : vector<16x128xi1> to vector<16x128xi32>
    %28 = arith.sitofp %27 : vector<16x128xi32> to vector<16x128xf32>
    %cst_7 = arith.constant 6.000000e-01 : f32
    %29 = vector.broadcast %cst_7 : f32 to vector<16x128xf32>
    %30 = arith.cmpf oge, %0, %29 : vector<16x128xf32>
    %31 = arith.extui %30 : vector<16x128xi1> to vector<16x128xi32>
    %32 = arith.sitofp %31 : vector<16x128xi32> to vector<16x128xf32>
    %cst_8 = arith.constant 1.000000e+00 : f32
    %33 = vector.broadcast %cst_8 : f32 to vector<16x128xf32>
    %34 = arith.cmpf oge, %0, %33 : vector<16x128xf32>
    %35 = arith.extui %34 : vector<16x128xi1> to vector<16x128xi32>
    %36 = arith.sitofp %35 : vector<16x128xi32> to vector<16x128xf32>
    %cst_9 = arith.constant 1.400000e+00 : f32
    %37 = vector.broadcast %cst_9 : f32 to vector<16x128xf32>
    %38 = arith.cmpf oge, %0, %37 : vector<16x128xf32>
    %39 = arith.extui %38 : vector<16x128xi1> to vector<16x128xi32>
    %40 = arith.sitofp %39 : vector<16x128xi32> to vector<16x128xf32>
    %cst_10 = arith.constant 1.800000e+00 : f32
    %41 = vector.broadcast %cst_10 : f32 to vector<16x128xf32>
    %42 = arith.cmpf oge, %0, %41 : vector<16x128xf32>
    %43 = arith.extui %42 : vector<16x128xi1> to vector<16x128xi32>
    %44 = arith.sitofp %43 : vector<16x128xi32> to vector<16x128xf32>
    %cst_11 = arith.constant 2.200000e+00 : f32
    %45 = vector.broadcast %cst_11 : f32 to vector<16x128xf32>
    %46 = arith.cmpf oge, %0, %45 : vector<16x128xf32>
    %47 = arith.extui %46 : vector<16x128xi1> to vector<16x128xi32>
    %48 = arith.sitofp %47 : vector<16x128xi32> to vector<16x128xf32>
    %49 = arith.subf %4, %8 : vector<16x128xf32>
    %50 = arith.subf %8, %12 : vector<16x128xf32>
    %51 = arith.subf %12, %16 : vector<16x128xf32>
    %52 = arith.subf %16, %20 : vector<16x128xf32>
    %53 = arith.subf %20, %24 : vector<16x128xf32>
    %54 = arith.subf %24, %28 : vector<16x128xf32>
    %55 = arith.subf %28, %32 : vector<16x128xf32>
    %56 = arith.subf %32, %36 : vector<16x128xf32>
    %57 = arith.subf %36, %40 : vector<16x128xf32>
    %58 = arith.subf %40, %44 : vector<16x128xf32>
    %59 = arith.subf %44, %48 : vector<16x128xf32>
    %cst_12 = arith.constant -2.200000e+00 : f32
    %60 = vector.broadcast %cst_12 : f32 to vector<16x128xf32>
    %61 = arith.subf %0, %60 : vector<16x128xf32>
    %cst_13 = arith.constant -1.800000e+00 : f32
    %62 = vector.broadcast %cst_13 : f32 to vector<16x128xf32>
    %63 = arith.subf %0, %62 : vector<16x128xf32>
    %cst_14 = arith.constant -1.400000e+00 : f32
    %64 = vector.broadcast %cst_14 : f32 to vector<16x128xf32>
    %65 = arith.subf %0, %64 : vector<16x128xf32>
    %cst_15 = arith.constant -1.000000e+00 : f32
    %66 = vector.broadcast %cst_15 : f32 to vector<16x128xf32>
    %67 = arith.subf %0, %66 : vector<16x128xf32>
    %cst_16 = arith.constant -6.000000e-01 : f32
    %68 = vector.broadcast %cst_16 : f32 to vector<16x128xf32>
    %69 = arith.subf %0, %68 : vector<16x128xf32>
    %cst_17 = arith.constant -2.000000e-01 : f32
    %70 = vector.broadcast %cst_17 : f32 to vector<16x128xf32>
    %71 = arith.subf %0, %70 : vector<16x128xf32>
    %cst_18 = arith.constant 2.000000e-01 : f32
    %72 = vector.broadcast %cst_18 : f32 to vector<16x128xf32>
    %73 = arith.subf %0, %72 : vector<16x128xf32>
    %cst_19 = arith.constant 6.000000e-01 : f32
    %74 = vector.broadcast %cst_19 : f32 to vector<16x128xf32>
    %75 = arith.subf %0, %74 : vector<16x128xf32>
    %cst_20 = arith.constant 1.000000e+00 : f32
    %76 = vector.broadcast %cst_20 : f32 to vector<16x128xf32>
    %77 = arith.subf %0, %76 : vector<16x128xf32>
    %cst_21 = arith.constant 1.400000e+00 : f32
    %78 = vector.broadcast %cst_21 : f32 to vector<16x128xf32>
    %79 = arith.subf %0, %78 : vector<16x128xf32>
    %cst_22 = arith.constant 1.800000e+00 : f32
    %80 = vector.broadcast %cst_22 : f32 to vector<16x128xf32>
    %81 = arith.subf %0, %80 : vector<16x128xf32>
    %cst_23 = arith.constant 2.200000e+00 : f32
    %82 = vector.broadcast %cst_23 : f32 to vector<16x128xf32>
    %83 = arith.subf %0, %82 : vector<16x128xf32>
    %84 = arith.mulf %61, %49 : vector<16x128xf32>
    %85 = arith.mulf %65, %50 : vector<16x128xf32>
    %86 = arith.subf %84, %85 : vector<16x128xf32>
    %87 = arith.mulf %63, %50 : vector<16x128xf32>
    %88 = arith.mulf %67, %51 : vector<16x128xf32>
    %89 = arith.subf %87, %88 : vector<16x128xf32>
    %90 = arith.mulf %65, %51 : vector<16x128xf32>
    %91 = arith.mulf %69, %52 : vector<16x128xf32>
    %92 = arith.subf %90, %91 : vector<16x128xf32>
    %93 = arith.mulf %67, %52 : vector<16x128xf32>
    %94 = arith.mulf %71, %53 : vector<16x128xf32>
    %95 = arith.subf %93, %94 : vector<16x128xf32>
    %96 = arith.mulf %69, %53 : vector<16x128xf32>
    %97 = arith.mulf %73, %54 : vector<16x128xf32>
    %98 = arith.subf %96, %97 : vector<16x128xf32>
    %99 = arith.mulf %71, %54 : vector<16x128xf32>
    %100 = arith.mulf %75, %55 : vector<16x128xf32>
    %101 = arith.subf %99, %100 : vector<16x128xf32>
    %102 = arith.mulf %73, %55 : vector<16x128xf32>
    %103 = arith.mulf %77, %56 : vector<16x128xf32>
    %104 = arith.subf %102, %103 : vector<16x128xf32>
    %105 = arith.mulf %75, %56 : vector<16x128xf32>
    %106 = arith.mulf %79, %57 : vector<16x128xf32>
    %107 = arith.subf %105, %106 : vector<16x128xf32>
    %108 = arith.mulf %77, %57 : vector<16x128xf32>
    %109 = arith.mulf %81, %58 : vector<16x128xf32>
    %110 = arith.subf %108, %109 : vector<16x128xf32>
    %111 = arith.mulf %79, %58 : vector<16x128xf32>
    %112 = arith.mulf %83, %59 : vector<16x128xf32>
    %113 = arith.subf %111, %112 : vector<16x128xf32>
    %114 = arith.mulf %61, %86 : vector<16x128xf32>
    %115 = arith.mulf %67, %89 : vector<16x128xf32>
    %116 = arith.subf %114, %115 : vector<16x128xf32>
    %117 = arith.mulf %63, %89 : vector<16x128xf32>
    %118 = arith.mulf %69, %92 : vector<16x128xf32>
    %119 = arith.subf %117, %118 : vector<16x128xf32>
    %120 = arith.mulf %65, %92 : vector<16x128xf32>
    %121 = arith.mulf %71, %95 : vector<16x128xf32>
    %122 = arith.subf %120, %121 : vector<16x128xf32>
    %123 = arith.mulf %67, %95 : vector<16x128xf32>
    %124 = arith.mulf %73, %98 : vector<16x128xf32>
    %125 = arith.subf %123, %124 : vector<16x128xf32>
    %126 = arith.mulf %69, %98 : vector<16x128xf32>
    %127 = arith.mulf %75, %101 : vector<16x128xf32>
    %128 = arith.subf %126, %127 : vector<16x128xf32>
    %129 = arith.mulf %71, %101 : vector<16x128xf32>
    %130 = arith.mulf %77, %104 : vector<16x128xf32>
    %131 = arith.subf %129, %130 : vector<16x128xf32>
    %132 = arith.mulf %73, %104 : vector<16x128xf32>
    %133 = arith.mulf %79, %107 : vector<16x128xf32>
    %134 = arith.subf %132, %133 : vector<16x128xf32>
    %135 = arith.mulf %75, %107 : vector<16x128xf32>
    %136 = arith.mulf %81, %110 : vector<16x128xf32>
    %137 = arith.subf %135, %136 : vector<16x128xf32>
    %138 = arith.mulf %77, %110 : vector<16x128xf32>
    %139 = arith.mulf %83, %113 : vector<16x128xf32>
    %140 = arith.subf %138, %139 : vector<16x128xf32>
    %141 = arith.mulf %61, %116 : vector<16x128xf32>
    %142 = arith.mulf %69, %119 : vector<16x128xf32>
    %143 = arith.subf %141, %142 : vector<16x128xf32>
    %144 = arith.mulf %63, %119 : vector<16x128xf32>
    %145 = arith.mulf %71, %122 : vector<16x128xf32>
    %146 = arith.subf %144, %145 : vector<16x128xf32>
    %147 = arith.mulf %65, %122 : vector<16x128xf32>
    %148 = arith.mulf %73, %125 : vector<16x128xf32>
    %149 = arith.subf %147, %148 : vector<16x128xf32>
    %150 = arith.mulf %67, %125 : vector<16x128xf32>
    %151 = arith.mulf %75, %128 : vector<16x128xf32>
    %152 = arith.subf %150, %151 : vector<16x128xf32>
    %153 = arith.mulf %69, %128 : vector<16x128xf32>
    %154 = arith.mulf %77, %131 : vector<16x128xf32>
    %155 = arith.subf %153, %154 : vector<16x128xf32>
    %156 = arith.mulf %71, %131 : vector<16x128xf32>
    %157 = arith.mulf %79, %134 : vector<16x128xf32>
    %158 = arith.subf %156, %157 : vector<16x128xf32>
    %159 = arith.mulf %73, %134 : vector<16x128xf32>
    %160 = arith.mulf %81, %137 : vector<16x128xf32>
    %161 = arith.subf %159, %160 : vector<16x128xf32>
    %162 = arith.mulf %75, %137 : vector<16x128xf32>
    %163 = arith.mulf %83, %140 : vector<16x128xf32>
    %164 = arith.subf %162, %163 : vector<16x128xf32>
    %165 = arith.negf %0 : vector<16x128xf32>
    %166 = math.exp %165 : vector<16x128xf32>
    %cst_24 = arith.constant 1.000000e+00 : f32
    %167 = vector.broadcast %cst_24 : f32 to vector<16x128xf32>
    %168 = arith.addf %167, %166 : vector<16x128xf32>
    %169 = arith.divf %167, %168 : vector<16x128xf32>
    %170 = arith.mulf %0, %169 : vector<16x128xf32>
    %171 = tpu.concatenate %170, %143, %146, %149, %152, %155, %158, %161, %164 in 1 : vector<16x128xf32>, vector<16x128xf32>, vector<16x128xf32>, vector<16x128xf32>, vector<16x128xf32>, vector<16x128xf32>, vector<16x128xf32>, vector<16x128xf32>, vector<16x128xf32> -> vector<16x1152xf32>
    %c0_25 = arith.constant 0 : index
    %c0_26 = arith.constant 0 : index
    %172 = vector.load %arg2[%c0_25, %c0_26] : memref<1152x128xf32, #tpu.memory_space<vmem>>, vector<1152x128xf32>
    %cst_27 = arith.constant dense<0.000000e+00> : vector<16x128xf32>
    %173 = tpu.matmul %171, %172, %cst_27 {dimension_numbers = #tpu.dot_dimension_numbers<[1], [0], [0], [1], [0, 0, 1, 1], [], []>} : vector<16x1152xf32>, vector<1152x128xf32>, vector<16x128xf32> -> vector<16x128xf32>
    %c0_28 = arith.constant 0 : index
    %c0_29 = arith.constant 0 : index
    %174 = vector.load %arg3[%c0_28, %c0_29] : memref<16x128xf32, #tpu.memory_space<vmem>>, vector<16x128xf32>
    tpu.vector_store %arg3[%c0_28, %c0_29], %173 {strides = array<i32>} : memref<16x128xf32, #tpu.memory_space<vmem>>, vector<16x128xf32>,
    return
  }
  func.func @transform_0(%arg0: i32) -> (i32, i32) {
    %c0_i32 = arith.constant 0 : i32
    %c0_i32_0 = arith.constant 0 : i32
    return %arg0, %c0_i32 : i32, i32
  }
  func.func @transform_1(%arg0: i32) -> (i32, i32) {
    %c0_i32 = arith.constant 0 : i32
    %c0_i32_0 = arith.constant 0 : i32
    %c0_i32_1 = arith.constant 0 : i32
    return %c0_i32, %c0_i32_0 : i32, i32
  }
  func.func @transform_2(%arg0: i32) -> (i32, i32) {
    %c0_i32 = arith.constant 0 : i32
    %c0_i32_0 = arith.constant 0 : i32
    return %arg0, %c0_i32 : i32, i32
  }
}

</mosaic_0001>

<llo_original>
// kernel: tpu_custom_call.1
$region0: #{tpu_custom_call.1}
  #allocation0 [shape = 'u32[]', space=smem, size = 0x4, offset = 0x4, fixed_abs, tag = 'smem constant byte address 0x4 - core index']
  #allocation1 [shape = 'u32[144,128]{1,0:T(1,128)}', space=vmem, size = 0x12000, scoped, tag = 'internal scratch']
  %s0 = inlined_call_operand.hbm [shape: f32[16,128], index: 0, kind: input, shape index: {}]
  %s1 = inlined_call_operand.hbm [shape: f32[1152,128], index: 1, kind: input, shape index: {}]
  %s2 = inlined_call_operand.hbm [shape: f32[16,128], index: 2, kind: output, shape index: {}]
  %s3 = sld [smem:[#allocation0]]
  $region26: #{tpu_custom_call.1} parent=0
    _
  %s5 = ssub.s32 1, %s3
  %s6 = scalar_select 0, %s5, %s3
  $region1: #{tpu_custom_call.1} parent=0
    #allocation2 [shape = 'u8[8192]{0}', space=vmem, size = 0x2000, scoped, tag = 'input window, operand 0, single buffered']
    #allocation3 [shape = 's32[1]{0}', space=sflag, size = 0x4, scoped, tag = 'scoped memory for tpu_custom_call.1']
    #allocation4 [shape = 's32[1]{0}', space=sflag, size = 0x4, scoped, tag = 'scoped memory for tpu_custom_call.1']
    #allocation5 [shape = 'u8[589824]{0}', space=vmem, size = 0x90000, scoped, tag = 'input window, operand 1, single buffered']
    #allocation6 [shape = 's32[1]{0}', space=sflag, size = 0x4, scoped, tag = 'scoped memory for tpu_custom_call.1']
    #allocation7 [shape = 'u8[8192]{0}', space=vmem, size = 0x2000, scoped, tag = 'output window, operand 0, single buffered']
    %7 = vsyncpa [#allocation3], 0
    %8 = vsyncpa [#allocation6], 0
    %9 = vsyncpa [#allocation4], 0
    // Predicated region
    $region2: #{tpu_custom_call.1} parent=1 // pred_check
      _
    $region3: #{tpu_custom_call.1} parent=1 // pred_check_branch
      %11 = sbr.rel (0) target = $region5
    $region4: #{tpu_custom_call.1} parent=1 // pred_region
      %s13 = ssub.s32 256, 256
      %14 = vsyncadd [#allocation3], %s13
      %s15 = sshll.u32 [#allocation2], 4
      %s16 = int_to_ptr.vmem [resolvable:$true] %s15
      %21 = dma.hbm_to_vmem [thread:$0]  %s0, 256, %s16, [#allocation3], 128, 128, 8
    $region5: #{tpu_custom_call.1} parent=1 // pred_fallthru
      _
    // Predicated region
    $region6: #{tpu_custom_call.1} parent=1 // pred_check
      _
    $region7: #{tpu_custom_call.1} parent=1 // pred_check_branch
      %23 = sbr.rel (0) target = $region9
    $region8: #{tpu_custom_call.1} parent=1 // pred_region
      %s25 = ssub.s32 18432, 18432
      %26 = vsyncadd [#allocation6], %s25
      %s27 = sshll.u32 [#allocation5], 4
      %s28 = int_to_ptr.vmem [resolvable:$true] %s27
      %33 = dma.hbm_to_vmem [thread:$0]  %s1, 18432, %s28, [#allocation6], 128, 128, 8
    $region9: #{tpu_custom_call.1} parent=1 // pred_fallthru
      _
    // Predicated region
    $region10: #{tpu_custom_call.1} parent=1 // pred_check
      _
    $region11: #{tpu_custom_call.1} parent=1 // pred_check_branch
      %35 = sbr.rel (0) target = $region13
    $region12: #{tpu_custom_call.1} parent=1 // pred_region
      %36 = dma.done [#allocation3], 256
    $region13: #{tpu_custom_call.1} parent=1 // pred_fallthru
      _
    // Predicated region
    $region14: #{tpu_custom_call.1} parent=1 // pred_check
      _
    $region15: #{tpu_custom_call.1} parent=1 // pred_check_branch
      %38 = sbr.rel (0) target = $region17
    $region16: #{tpu_custom_call.1} parent=1 // pred_region
      %39 = dma.done [#allocation6], 18432
    $region17: #{tpu_custom_call.1} parent=1 // pred_fallthru
      _
    %v40 = vld [vmem:[#allocation2] sm:$0xff]
    %v41 = vld [vmem:[#allocation2 + $0x8] sm:$0xff]
    %vm42 = vcmp.ge.f32.partialorder %v40, -2.2
    %vm43 = vcmp.ge.f32.partialorder %v41, -2.2
    %v44 = vsel %vm42, 1, 0
    %v45 = vsel %vm43, 1, 0
    %v46 = vcvt.s32.f32 %v44
    %v47 = vcvt.s32.f32 %v45
    %vm48 = vcmp.ge.f32.partialorder %v40, -1.8
    %vm49 = vcmp.ge.f32.partialorder %v41, -1.8
    %v50 = vsel %vm48, 1, 0
    %v51 = vsel %vm49, 1, 0
    %v52 = vcvt.s32.f32 %v50
    %v53 = vcvt.s32.f32 %v51
    %vm54 = vcmp.ge.f32.partialorder %v40, -1.4
    %vm55 = vcmp.ge.f32.partialorder %v41, -1.4
    %v56 = vsel %vm54, 1, 0
    %v57 = vsel %vm55, 1, 0
    %v58 = vcvt.s32.f32 %v56
    %v59 = vcvt.s32.f32 %v57
    %vm60 = vcmp.ge.f32.partialorder %v40, -1.0
    %vm61 = vcmp.ge.f32.partialorder %v41, -1.0
    %v62 = vsel %vm60, 1, 0
    %v63 = vsel %vm61, 1, 0
    %v64 = vcvt.s32.f32 %v62
    %v65 = vcvt.s32.f32 %v63
    %vm66 = vcmp.ge.f32.partialorder %v40, -0.6
    %vm67 = vcmp.ge.f32.partialorder %v41, -0.6
    %v68 = vsel %vm66, 1, 0
    %v69 = vsel %vm67, 1, 0
    %v70 = vcvt.s32.f32 %v68
    %v71 = vcvt.s32.f32 %v69
    %vm72 = vcmp.ge.f32.partialorder %v40, -0.2
    %vm73 = vcmp.ge.f32.partialorder %v41, -0.2
    %v74 = vsel %vm72, 1, 0
    %v75 = vsel %vm73, 1, 0
    %v76 = vcvt.s32.f32 %v74
    %v77 = vcvt.s32.f32 %v75
    %vm78 = vcmp.ge.f32.partialorder %v40, 0.2
    %vm79 = vcmp.ge.f32.partialorder %v41, 0.2
    %v80 = vsel %vm78, 1, 0
    %v81 = vsel %vm79, 1, 0
    %v82 = vcvt.s32.f32 %v80
    %v83 = vcvt.s32.f32 %v81
    %vm84 = vcmp.ge.f32.partialorder %v40, 0.6
    %vm85 = vcmp.ge.f32.partialorder %v41, 0.6
    %v86 = vsel %vm84, 1, 0
    %v87 = vsel %vm85, 1, 0
    %v88 = vcvt.s32.f32 %v86
    %v89 = vcvt.s32.f32 %v87
    %vm90 = vcmp.ge.f32.partialorder %v40, 1.0
    %vm91 = vcmp.ge.f32.partialorder %v41, 1.0
    %v92 = vsel %vm90, 1, 0
    %v93 = vsel %vm91, 1, 0
    %v94 = vcvt.s32.f32 %v92
    %v95 = vcvt.s32.f32 %v93
    %vm96 = vcmp.ge.f32.partialorder %v40, 1.4
    %vm97 = vcmp.ge.f32.partialorder %v41, 1.4
    %v98 = vsel %vm96, 1, 0
    %v99 = vsel %vm97, 1, 0
    %v100 = vcvt.s32.f32 %v98
    %v101 = vcvt.s32.f32 %v99
    %vm102 = vcmp.ge.f32.partialorder %v40, 1.8
    %vm103 = vcmp.ge.f32.partialorder %v41, 1.8
    %v104 = vsel %vm102, 1, 0
    %v105 = vsel %vm103, 1, 0
    %v106 = vcvt.s32.f32 %v104
    %v107 = vcvt.s32.f32 %v105
    %vm108 = vcmp.ge.f32.partialorder %v40, 2.2
    %vm109 = vcmp.ge.f32.partialorder %v41, 2.2
    %v110 = vsel %vm108, 1, 0
    %v111 = vsel %vm109, 1, 0
    %v112 = vcvt.s32.f32 %v110
    %v113 = vcvt.s32.f32 %v111
    %v114 = vsub.f32 %v46, %v52
    %v115 = vsub.f32 %v47, %v53
    %v116 = vsub.f32 %v52, %v58
    %v117 = vsub.f32 %v53, %v59
    %v118 = vsub.f32 %v58, %v64
    %v119 = vsub.f32 %v59, %v65
    %v120 = vsub.f32 %v64, %v70
    %v121 = vsub.f32 %v65, %v71
    %v122 = vsub.f32 %v70, %v76
    %v123 = vsub.f32 %v71, %v77
    %v124 = vsub.f32 %v76, %v82
    %v125 = vsub.f32 %v77, %v83
    %v126 = vsub.f32 %v82, %v88
    %v127 = vsub.f32 %v83, %v89
    %v128 = vsub.f32 %v88, %v94
    %v129 = vsub.f32 %v89, %v95
    %v130 = vsub.f32 %v94, %v100
    %v131 = vsub.f32 %v95, %v101
    %v132 = vsub.f32 %v100, %v106
    %v133 = vsub.f32 %v101, %v107
    %v134 = vsub.f32 %v106, %v112
    %v135 = vsub.f32 %v107, %v113
    %v136 = vsub.f32 %v40, -2.2
    %v137 = vsub.f32 %v41, -2.2
    %v138 = vsub.f32 %v40, -1.8
    %v139 = vsub.f32 %v41, -1.8
    %v140 = vsub.f32 %v40, -1.4
    %v141 = vsub.f32 %v41, -1.4
    %v142 = vsub.f32 %v40, -1.0
    %v143 = vsub.f32 %v41, -1.0
    %v144 = vsub.f32 %v40, -0.6
    %v145 = vsub.f32 %v41, -0.6
    %v146 = vsub.f32 %v40, -0.2
    %v147 = vsub.f32 %v41, -0.2
    %v148 = vsub.f32 %v40, 0.2
    %v149 = vsub.f32 %v41, 0.2
    %v150 = vsub.f32 %v40, 0.6
    %v151 = vsub.f32 %v41, 0.6
    %v152 = vsub.f32 %v40, 1.0
    %v153 = vsub.f32 %v41, 1.0
    %v154 = vsub.f32 %v40, 1.4
    %v155 = vsub.f32 %v41, 1.4
    %v156 = vsub.f32 %v40, 1.8
    %v157 = vsub.f32 %v41, 1.8
    %v158 = vsub.f32 %v40, 2.2
    %v159 = vsub.f32 %v41, 2.2
    %v160 = vmul.f32 %v136, %v114
    %v161 = vmul.f32 %v137, %v115
    %v162 = vmul.f32 %v140, %v116
    %v163 = vmul.f32 %v141, %v117
    %v164 = vsub.f32 %v160, %v162
    %v165 = vsub.f32 %v161, %v163
    %v166 = vmul.f32 %v138, %v116
    %v167 = vmul.f32 %v139, %v117
    %v168 = vmul.f32 %v142, %v118
    %v169 = vmul.f32 %v143, %v119
    %v170 = vsub.f32 %v166, %v168
    %v171 = vsub.f32 %v167, %v169
    %v172 = vmul.f32 %v140, %v118
    %v173 = vmul.f32 %v141, %v119
    %v174 = vmul.f32 %v144, %v120
    %v175 = vmul.f32 %v145, %v121
    %v176 = vsub.f32 %v172, %v174
    %v177 = vsub.f32 %v173, %v175
    %v178 = vmul.f32 %v142, %v120
    %v179 = vmul.f32 %v143, %v121
    %v180 = vmul.f32 %v146, %v122
    %v181 = vmul.f32 %v147, %v123
    %v182 = vsub.f32 %v178, %v180
    %v183 = vsub.f32 %v179, %v181
    %v184 = vmul.f32 %v144, %v122
    %v185 = vmul.f32 %v145, %v123
    %v186 = vmul.f32 %v148, %v124
    %v187 = vmul.f32 %v149, %v125
    %v188 = vsub.f32 %v184, %v186
    %v189 = vsub.f32 %v185, %v187
    %v190 = vmul.f32 %v146, %v124
    %v191 = vmul.f32 %v147, %v125
    %v192 = vmul.f32 %v150, %v126
    %v193 = vmul.f32 %v151, %v127
    %v194 = vsub.f32 %v190, %v192
    %v195 = vsub.f32 %v191, %v193
    %v196 = vmul.f32 %v148, %v126
    %v197 = vmul.f32 %v149, %v127
    %v198 = vmul.f32 %v152, %v128
    %v199 = vmul.f32 %v153, %v129
    %v200 = vsub.f32 %v196, %v198
    %v201 = vsub.f32 %v197, %v199
    %v202 = vmul.f32 %v150, %v128
    %v203 = vmul.f32 %v151, %v129
    %v204 = vmul.f32 %v154, %v130
    %v205 = vmul.f32 %v155, %v131
    %v206 = vsub.f32 %v202, %v204
    %v207 = vsub.f32 %v203, %v205
    %v208 = vmul.f32 %v152, %v130
    %v209 = vmul.f32 %v153, %v131
    %v210 = vmul.f32 %v156, %v132
    %v211 = vmul.f32 %v157, %v133
    %v212 = vsub.f32 %v208, %v210
    %v213 = vsub.f32 %v209, %v211
    %v214 = vmul.f32 %v154, %v132
    %v215 = vmul.f32 %v155, %v133
    %v216 = vmul.f32 %v158, %v134
    %v217 = vmul.f32 %v159, %v135
    %v218 = vsub.f32 %v214, %v216
    %v219 = vsub.f32 %v215, %v217
    %v220 = vmul.f32 %v136, %v164
    %v221 = vmul.f32 %v137, %v165
    %v222 = vmul.f32 %v142, %v170
    %v223 = vmul.f32 %v143, %v171
    %v224 = vsub.f32 %v220, %v222
    %v225 = vsub.f32 %v221, %v223
    %v226 = vmul.f32 %v138, %v170
    %v227 = vmul.f32 %v139, %v171
    %v228 = vmul.f32 %v144, %v176
    %v229 = vmul.f32 %v145, %v177
    %v230 = vsub.f32 %v226, %v228
    %v231 = vsub.f32 %v227, %v229
    %v232 = vmul.f32 %v140, %v176
    %v233 = vmul.f32 %v141, %v177
    %v234 = vmul.f32 %v146, %v182
    %v235 = vmul.f32 %v147, %v183
    %v236 = vsub.f32 %v232, %v234
    %v237 = vsub.f32 %v233, %v235
    %v238 = vmul.f32 %v142, %v182
    %v239 = vmul.f32 %v143, %v183
    %v240 = vmul.f32 %v148, %v188
    %v241 = vmul.f32 %v149, %v189
    %v242 = vsub.f32 %v238, %v240
    %v243 = vsub.f32 %v239, %v241
    %v244 = vmul.f32 %v144, %v188
    %v245 = vmul.f32 %v145, %v189
    %v246 = vmul.f32 %v150, %v194
    %v247 = vmul.f32 %v151, %v195
    %v248 = vsub.f32 %v244, %v246
    %v249 = vsub.f32 %v245, %v247
    %v250 = vmul.f32 %v146, %v194
    %v251 = vmul.f32 %v147, %v195
    %v252 = vmul.f32 %v152, %v200
    %v253 = vmul.f32 %v153, %v201
    %v254 = vsub.f32 %v250, %v252
    %v255 = vsub.f32 %v251, %v253
    %v256 = vmul.f32 %v148, %v200
    %v257 = vmul.f32 %v149, %v201
    %v258 = vmul.f32 %v154, %v206
    %v259 = vmul.f32 %v155, %v207
    %v260 = vsub.f32 %v256, %v258
    %v261 = vsub.f32 %v257, %v259
    %v262 = vmul.f32 %v150, %v206
    %v263 = vmul.f32 %v151, %v207
    %v264 = vmul.f32 %v156, %v212
    %v265 = vmul.f32 %v157, %v213
    %v266 = vsub.f32 %v262, %v264
    %v267 = vsub.f32 %v263, %v265
    %v268 = vmul.f32 %v152, %v212
    %v269 = vmul.f32 %v153, %v213
    %v270 = vmul.f32 %v158, %v218
    %v271 = vmul.f32 %v159, %v219
    %v272 = vsub.f32 %v268, %v270
    %v273 = vsub.f32 %v269, %v271
    %v274 = vmul.f32 %v136, %v224
    %v275 = vmul.f32 %v137, %v225
    %v276 = vmul.f32 %v144, %v230
    %v277 = vmul.f32 %v145, %v231
    %v278 = vsub.f32 %v274, %v276
    %v279 = vsub.f32 %v275, %v277
    %v280 = vmul.f32 %v138, %v230
    %v281 = vmul.f32 %v139, %v231
    %v282 = vmul.f32 %v146, %v236
    %v283 = vmul.f32 %v147, %v237
    %v284 = vsub.f32 %v280, %v282
    %v285 = vsub.f32 %v281, %v283
    %v286 = vmul.f32 %v140, %v236
    %v287 = vmul.f32 %v141, %v237
    %v288 = vmul.f32 %v148, %v242
    %v289 = vmul.f32 %v149, %v243
    %v290 = vsub.f32 %v286, %v288
    %v291 = vsub.f32 %v287, %v289
    %v292 = vmul.f32 %v142, %v242
    %v293 = vmul.f32 %v143, %v243
    %v294 = vmul.f32 %v150, %v248
    %v295 = vmul.f32 %v151, %v249
    %v296 = vsub.f32 %v292, %v294
    %v297 = vsub.f32 %v293, %v295
    %v298 = vmul.f32 %v144, %v248
    %v299 = vmul.f32 %v145, %v249
    %v300 = vmul.f32 %v152, %v254
    %v301 = vmul.f32 %v153, %v255
    %v302 = vsub.f32 %v298, %v300
    %v303 = vsub.f32 %v299, %v301
    %v304 = vmul.f32 %v146, %v254
    %v305 = vmul.f32 %v147, %v255
    %v306 = vmul.f32 %v154, %v260
    %v307 = vmul.f32 %v155, %v261
    %v308 = vsub.f32 %v304, %v306
    %v309 = vsub.f32 %v305, %v307
    %v310 = vmul.f32 %v148, %v260
    %v311 = vmul.f32 %v149, %v261
    %v312 = vmul.f32 %v156, %v266
    %v313 = vmul.f32 %v157, %v267
    %v314 = vsub.f32 %v310, %v312
    %v315 = vsub.f32 %v311, %v313
    %v316 = vmul.f32 %v150, %v266
    %v317 = vmul.f32 %v151, %v267
    %v318 = vmul.f32 %v158, %v272
    %v319 = vmul.f32 %v159, %v273
    %v320 = vsub.f32 %v316, %v318
    %v321 = vsub.f32 %v317, %v319
    %v322 = vxor.u32 %v40, 2147483648
    %v323 = vxor.u32 %v41, 2147483648
    %v324 = vmul.f32 %v322, 1.442695
    %v325 = vpow.pop %v324
    %v326 = vmul.f32 %v323, 1.442695
    %v327 = vpow.pop %v326
    %v328 = vadd.f32 %v325, 1.0
    %v329 = vadd.f32 %v327, 1.0
    %v330 = vrcp.pop %v328
    %v331 = vmul.f32 1.0, %v330
    %v332 = vrcp.pop %v329
    %v333 = vmul.f32 1.0, %v332
    %v334 = vmul.f32 %v40, %v331
    %v335 = vmul.f32 %v41, %v333
    %v336 = vld [vmem:[#allocation5] sm:$0xff]
    %v337 = vld [vmem:[#allocation5 + $0x8] sm:$0xff]
    %v338 = vld [vmem:[#allocation5 + $0x10] sm:$0xff]
    %v339 = vld [vmem:[#allocation5 + $0x18] sm:$0xff]
    %v340 = vld [vmem:[#allocation5 + $0x20] sm:$0xff]
    %v341 = vld [vmem:[#allocation5 + $0x28] sm:$0xff]
    %v342 = vld [vmem:[#allocation5 + $0x30] sm:$0xff]
    %v343 = vld [vmem:[#allocation5 + $0x38] sm:$0xff]
    %v344 = vld [vmem:[#allocation5 + $0x40] sm:$0xff]
    %v345 = vld [vmem:[#allocation5 + $0x48] sm:$0xff]
    %v346 = vld [vmem:[#allocation5 + $0x50] sm:$0xff]
    %v347 = vld [vmem:[#allocation5 + $0x58] sm:$0xff]
    %v348 = vld [vmem:[#allocation5 + $0x60] sm:$0xff]
    %v349 = vld [vmem:[#allocation5 + $0x68] sm:$0xff]
    %v350 = vld [vmem:[#allocation5 + $0x70] sm:$0xff]
    %v351 = vld [vmem:[#allocation5 + $0x78] sm:$0xff]
    %v352 = vld [vmem:[#allocation5 + $0x80] sm:$0xff]
    %v353 = vld [vmem:[#allocation5 + $0x88] sm:$0xff]
    %v354 = vld [vmem:[#allocation5 + $0x90] sm:$0xff]
    %v355 = vld [vmem:[#allocation5 + $0x98] sm:$0xff]
    %v356 = vld [vmem:[#allocation5 + $0xa0] sm:$0xff]
    %v357 = vld [vmem:[#allocation5 + $0xa8] sm:$0xff]
    %v358 = vld [vmem:[#allocation5 + $0xb0] sm:$0xff]
    %v359 = vld [vmem:[#allocation5 + $0xb8] sm:$0xff]
    %v360 = vld [vmem:[#allocation5 + $0xc0] sm:$0xff]
    %v361 = vld [vmem:[#allocation5 + $0xc8] sm:$0xff]
    %v362 = vld [vmem:[#allocation5 + $0xd0] sm:$0xff]
    %v363 = vld [vmem:[#allocation5 + $0xd8] sm:$0xff]
    %v364 = vld [vmem:[#allocation5 + $0xe0] sm:$0xff]
    %v365 = vld [vmem:[#allocation5 + $0xe8] sm:$0xff]
    %v366 = vld [vmem:[#allocation5 + $0xf0] sm:$0xff]
    %v367 = vld [vmem:[#allocation5 + $0xf8] sm:$0xff]
    %v368 = vld [vmem:[#allocation5 + $0x100] sm:$0xff]
    %v369 = vld [vmem:[#allocation5 + $0x108] sm:$0xff]
    %v370 = vld [vmem:[#allocation5 + $0x110] sm:$0xff]
    %v371 = vld [vmem:[#allocation5 + $0x118] sm:$0xff]
    %v372 = vld [vmem:[#allocation5 + $0x120] sm:$0xff]
    %v373 = vld [vmem:[#allocation5 + $0x128] sm:$0xff]
    %v374 = vld [vmem:[#allocation5 + $0x130] sm:$0xff]
    %v375 = vld [vmem:[#allocation5 + $0x138] sm:$0xff]
    %v376 = vld [vmem:[#allocation5 + $0x140] sm:$0xff]
    %v377 = vld [vmem:[#allocation5 + $0x148] sm:$0xff]
    %v378 = vld [vmem:[#allocation5 + $0x150] sm:$0xff]
    %v379 = vld [vmem:[#allocation5 + $0x158] sm:$0xff]
    %v380 = vld [vmem:[#allocation5 + $0x160] sm:$0xff]
    %v381 = vld [vmem:[#allocation5 + $0x168] sm:$0xff]
    %v382 = vld [vmem:[#allocation5 + $0x170] sm:$0xff]
    %v383 = vld [vmem:[#allocation5 + $0x178] sm:$0xff]
    %v384 = vld [vmem:[#allocation5 + $0x180] sm:$0xff]
    %v385 = vld [vmem:[#allocation5 + $0x188] sm:$0xff]
    %v386 = vld [vmem:[#allocation5 + $0x190] sm:$0xff]
    %v387 = vld [vmem:[#allocation5 + $0x198] sm:$0xff]
    %v388 = vld [vmem:[#allocation5 + $0x1a0] sm:$0xff]
    %v389 = vld [vmem:[#allocation5 + $0x1a8] sm:$0xff]
    %v390 = vld [vmem:[#allocation5 + $0x1b0] sm:$0xff]
    %v391 = vld [vmem:[#allocation5 + $0x1b8] sm:$0xff]
    %v392 = vld [vmem:[#allocation5 + $0x1c0] sm:$0xff]
    %v393 = vld [vmem:[#allocation5 + $0x1c8] sm:$0xff]
    %v394 = vld [vmem:[#allocation5 + $0x1d0] sm:$0xff]
    %v395 = vld [vmem:[#allocation5 + $0x1d8] sm:$0xff]
    %v396 = vld [vmem:[#allocation5 + $0x1e0] sm:$0xff]
    %v397 = vld [vmem:[#allocation5 + $0x1e8] sm:$0xff]
    %v398 = vld [vmem:[#allocation5 + $0x1f0] sm:$0xff]
    %v399 = vld [vmem:[#allocation5 + $0x1f8] sm:$0xff]
    %v400 = vld [vmem:[#allocation5 + $0x200] sm:$0xff]
    %v401 = vld [vmem:[#allocation5 + $0x208] sm:$0xff]
    %v402 = vld [vmem:[#allocation5 + $0x210] sm:$0xff]
    %v403 = vld [vmem:[#allocation5 + $0x218] sm:$0xff]
    %v404 = vld [vmem:[#allocation5 + $0x220] sm:$0xff]
    %v405 = vld [vmem:[#allocation5 + $0x228] sm:$0xff]
    %v406 = vld [vmem:[#allocation5 + $0x230] sm:$0xff]
    %v407 = vld [vmem:[#allocation5 + $0x238] sm:$0xff]
    %v408 = vld [vmem:[#allocation5 + $0x240] sm:$0xff]
    %v409 = vld [vmem:[#allocation5 + $0x248] sm:$0xff]
    %v410 = vld [vmem:[#allocation5 + $0x250] sm:$0xff]
    %v411 = vld [vmem:[#allocation5 + $0x258] sm:$0xff]
    %v412 = vld [vmem:[#allocation5 + $0x260] sm:$0xff]
    %v413 = vld [vmem:[#allocation5 + $0x268] sm:$0xff]
    %v414 = vld [vmem:[#allocation5 + $0x270] sm:$0xff]
    %v415 = vld [vmem:[#allocation5 + $0x278] sm:$0xff]
    %v416 = vld [vmem:[#allocation5 + $0x280] sm:$0xff]
    %v417 = vld [vmem:[#allocation5 + $0x288] sm:$0xff]
    %v418 = vld [vmem:[#allocation5 + $0x290] sm:$0xff]
    %v419 = vld [vmem:[#allocation5 + $0x298] sm:$0xff]
    %v420 = vld [vmem:[#allocation5 + $0x2a0] sm:$0xff]
    %v421 = vld [vmem:[#allocation5 + $0x2a8] sm:$0xff]
    %v422 = vld [vmem:[#allocation5 + $0x2b0] sm:$0xff]
    %v423 = vld [vmem:[#allocation5 + $0x2b8] sm:$0xff]
    %v424 = vld [vmem:[#allocation5 + $0x2c0] sm:$0xff]
    %v425 = vld [vmem:[#allocation5 + $0x2c8] sm:$0xff]
    %v426 = vld [vmem:[#allocation5 + $0x2d0] sm:$0xff]
    %v427 = vld [vmem:[#allocation5 + $0x2d8] sm:$0xff]
    %v428 = vld [vmem:[#allocation5 + $0x2e0] sm:$0xff]
    %v429 = vld [vmem:[#allocation5 + $0x2e8] sm:$0xff]
    %v430 = vld [vmem:[#allocation5 + $0x2f0] sm:$0xff]
    %v431 = vld [vmem:[#allocation5 + $0x2f8] sm:$0xff]
    %v432 = vld [vmem:[#allocation5 + $0x300] sm:$0xff]
    %v433 = vld [vmem:[#allocation5 + $0x308] sm:$0xff]
    %v434 = vld [vmem:[#allocation5 + $0x310] sm:$0xff]
    %v435 = vld [vmem:[#allocation5 + $0x318] sm:$0xff]
    %v436 = vld [vmem:[#allocation5 + $0x320] sm:$0xff]
    %v437 = vld [vmem:[#allocation5 + $0x328] sm:$0xff]
    %v438 = vld [vmem:[#allocation5 + $0x330] sm:$0xff]
    %v439 = vld [vmem:[#allocation5 + $0x338] sm:$0xff]
    %v440 = vld [vmem:[#allocation5 + $0x340] sm:$0xff]
    %v441 = vld [vmem:[#allocation5 + $0x348] sm:$0xff]
    %v442 = vld [vmem:[#allocation5 + $0x350] sm:$0xff]
    %v443 = vld [vmem:[#allocation5 + $0x358] sm:$0xff]
    %v444 = vld [vmem:[#allocation5 + $0x360] sm:$0xff]
    %v445 = vld [vmem:[#allocation5 + $0x368] sm:$0xff]
    %v446 = vld [vmem:[#allocation5 + $0x370] sm:$0xff]
    %v447 = vld [vmem:[#allocation5 + $0x378] sm:$0xff]
    %v448 = vld [vmem:[#allocation5 + $0x380] sm:$0xff]
    %v449 = vld [vmem:[#allocation5 + $0x388] sm:$0xff]
    %v450 = vld [vmem:[#allocation5 + $0x390] sm:$0xff]
    %v451 = vld [vmem:[#allocation5 + $0x398] sm:$0xff]
    %v452 = vld [vmem:[#allocation5 + $0x3a0] sm:$0xff]
    %v453 = vld [vmem:[#allocation5 + $0x3a8] sm:$0xff]
    %v454 = vld [vmem:[#allocation5 + $0x3b0] sm:$0xff]
    %v455 = vld [vmem:[#allocation5 + $0x3b8] sm:$0xff]
    %v456 = vld [vmem:[#allocation5 + $0x3c0] sm:$0xff]
    %v457 = vld [vmem:[#allocation5 + $0x3c8] sm:$0xff]
    %v458 = vld [vmem:[#allocation5 + $0x3d0] sm:$0xff]
    %v459 = vld [vmem:[#allocation5 + $0x3d8] sm:$0xff]
    %v460 = vld [vmem:[#allocation5 + $0x3e0] sm:$0xff]
    %v461 = vld [vmem:[#allocation5 + $0x3e8] sm:$0xff]
    %v462 = vld [vmem:[#allocation5 + $0x3f0] sm:$0xff]
    %v463 = vld [vmem:[#allocation5 + $0x3f8] sm:$0xff]
    %v464 = vld [vmem:[#allocation5 + $0x400] sm:$0xff]
    %v465 = vld [vmem:[#allocation5 + $0x408] sm:$0xff]
    %v466 = vld [vmem:[#allocation5 + $0x410] sm:$0xff]
    %v467 = vld [vmem:[#allocation5 + $0x418] sm:$0xff]
    %v468 = vld [vmem:[#allocation5 + $0x420] sm:$0xff]
    %v469 = vld [vmem:[#allocation5 + $0x428] sm:$0xff]
    %v470 = vld [vmem:[#allocation5 + $0x430] sm:$0xff]
    %v471 = vld [vmem:[#allocation5 + $0x438] sm:$0xff]
    %v472 = vld [vmem:[#allocation5 + $0x440] sm:$0xff]
    %v473 = vld [vmem:[#allocation5 + $0x448] sm:$0xff]
    %v474 = vld [vmem:[#allocation5 + $0x450] sm:$0xff]
    %v475 = vld [vmem:[#allocation5 + $0x458] sm:$0xff]
    %v476 = vld [vmem:[#allocation5 + $0x460] sm:$0xff]
    %v477 = vld [vmem:[#allocation5 + $0x468] sm:$0xff]
    %v478 = vld [vmem:[#allocation5 + $0x470] sm:$0xff]
    %v479 = vld [vmem:[#allocation5 + $0x478] sm:$0xff]
    %480 = vmatprep.subr.mxu0 0.0
    %481 = vmatpush1.msra.mxu0 %v336
    %482 = vmatprep.subr.mxu0 0.0
    %483 = vmatpush1.msra.mxu0 %v337
    %484 = vmatprep.subr.mxu0 0.0
    %485 = vmatpush1.msra.mxu0 %v338
    %486 = vmatprep.subr.mxu0 0.0
    %487 = vmatpush1.msra.mxu0 %v339
    %488 = vmatprep.subr.mxu0 0.0
    %489 = vmatpush1.msra.mxu0 %v340
    %490 = vmatprep.subr.mxu0 0.0
    %491 = vmatpush1.msra.mxu0 %v341
    %492 = vmatprep.subr.mxu0 0.0
    %493 = vmatpush1.msra.mxu0 %v342
    %494 = vmatprep.subr.mxu0 0.0
    %495 = vmatpush1.msra.mxu0 %v343
    %496 = vmatprep.subr.mxu0 0.0
    %497 = vmatpush1.msra.mxu0 %v344
    %498 = vmatprep.subr.mxu0 0.0
    %499 = vmatpush1.msra.mxu0 %v345
    %500 = vmatprep.subr.mxu0 0.0
    %501 = vmatpush1.msra.mxu0 %v346
    %502 = vmatprep.subr.mxu0 0.0
    %503 = vmatpush1.msra.mxu0 %v347
    %504 = vmatprep.subr.mxu0 0.0
    %505 = vmatpush1.msra.mxu0 %v348
    %506 = vmatprep.subr.mxu0 0.0
    %507 = vmatpush1.msra.mxu0 %v349
    %508 = vmatprep.subr.mxu0 0.0
    %509 = vmatpush1.msra.mxu0 %v350
    %510 = vmatprep.subr.mxu0 0.0
    %511 = vmatpush1.msra.mxu0 %v351
    %512 = vmatprep.subr.mxu0 0.0
    %513 = vmatpush1.msra.mxu0 %v352
    %514 = vmatprep.subr.mxu0 0.0
    %515 = vmatpush1.msra.mxu0 %v353
    %516 = vmatprep.subr.mxu0 0.0
    %517 = vmatpush1.msra.mxu0 %v354
    %518 = vmatprep.subr.mxu0 0.0
    %519 = vmatpush1.msra.mxu0 %v355
    %520 = vmatprep.subr.mxu0 0.0
    %521 = vmatpush1.msra.mxu0 %v356
    %522 = vmatprep.subr.mxu0 0.0
    %523 = vmatpush1.msra.mxu0 %v357
    %524 = vmatprep.subr.mxu0 0.0
    %525 = vmatpush1.msra.mxu0 %v358
    %526 = vmatprep.subr.mxu0 0.0
    %527 = vmatpush1.msra.mxu0 %v359
    %528 = vmatprep.subr.mxu0 0.0
    %529 = vmatpush1.msra.mxu0 %v360
    %530 = vmatprep.subr.mxu0 0.0
    %531 = vmatpush1.msra.mxu0 %v361
    %532 = vmatprep.subr.mxu0 0.0
    %533 = vmatpush1.msra.mxu0 %v362
    %534 = vmatprep.subr.mxu0 0.0
    %535 = vmatpush1.msra.mxu0 %v363
    %536 = vmatprep.subr.mxu0 0.0
    %537 = vmatpush1.msra.mxu0 %v364
    %538 = vmatprep.subr.mxu0 0.0
    %539 = vmatpush1.msra.mxu0 %v365
    %540 = vmatprep.subr.mxu0 0.0
    %541 = vmatpush1.msra.mxu0 %v366
    %542 = vmatprep.subr.mxu0 0.0
    %543 = vmatpush1.msra.mxu0 %v367
    %544 = vmatprep.mubr.f32.mxu0 %v278
    %545 = vmatmul.mubr.f32.gmra.mrb[0].mxu0 %v334
    %v546 = vpop.f32.mrb[0].mxu0
    %v547 = vadd.f32 0.0, %v546
    %v548 = vpop.f32.mrb[0].mxu0
    %549 = vmatprep.mubr.f32.mxu0 %v279
    %550 = vmatmul.mubr.f32.gmra.mrb[0].mxu0 %v335
    %v551 = vpop.f32.mrb[0].mxu0
    %v552 = vadd.f32 0.0, %v551
    %v553 = vpop.f32.mrb[0].mxu0
    %554 = vdwg.mxu0
    %555 = vmatprep.subr.mxu0 0.0
    %556 = vmatpush1.msra.mxu0 %v368
    %557 = vmatprep.subr.mxu0 0.0
    %558 = vmatpush1.msra.mxu0 %v369
    %559 = vmatprep.subr.mxu0 0.0
    %560 = vmatpush1.msra.mxu0 %v370
    %561 = vmatprep.subr.mxu0 0.0
    %562 = vmatpush1.msra.mxu0 %v371
    %563 = vmatprep.subr.mxu0 0.0
    %564 = vmatpush1.msra.mxu0 %v372
    %565 = vmatprep.subr.mxu0 0.0
    %566 = vmatpush1.msra.mxu0 %v373
    %567 = vmatprep.subr.mxu0 0.0
    %568 = vmatpush1.msra.mxu0 %v374
    %569 = vmatprep.subr.mxu0 0.0
    %570 = vmatpush1.msra.mxu0 %v375
    %571 = vmatprep.subr.mxu0 0.0
    %572 = vmatpush1.msra.mxu0 %v376
    %573 = vmatprep.subr.mxu0 0.0
    %574 = vmatpush1.msra.mxu0 %v377
    %575 = vmatprep.subr.mxu0 0.0
    %576 = vmatpush1.msra.mxu0 %v378
    %577 = vmatprep.subr.mxu0 0.0
    %578 = vmatpush1.msra.mxu0 %v379
    %579 = vmatprep.subr.mxu0 0.0
    %580 = vmatpush1.msra.mxu0 %v380
    %581 = vmatprep.subr.mxu0 0.0
    %582 = vmatpush1.msra.mxu0 %v381
    %583 = vmatprep.subr.mxu0 0.0
    %584 = vmatpush1.msra.mxu0 %v382
    %585 = vmatprep.subr.mxu0 0.0
    %586 = vmatpush1.msra.mxu0 %v383
    %587 = vmatprep.subr.mxu0 0.0
    %588 = vmatpush1.msra.mxu0 %v384
    %589 = vmatprep.subr.mxu0 0.0
    %590 = vmatpush1.msra.mxu0 %v385
    %591 = vmatprep.subr.mxu0 0.0
    %592 = vmatpush1.msra.mxu0 %v386
    %593 = vmatprep.subr.mxu0 0.0
    %594 = vmatpush1.msra.mxu0 %v387
    %595 = vmatprep.subr.mxu0 0.0
    %596 = vmatpush1.msra.mxu0 %v388
    %597 = vmatprep.subr.mxu0 0.0
    %598 = vmatpush1.msra.mxu0 %v389
    %599 = vmatprep.subr.mxu0 0.0
    %600 = vmatpush1.msra.mxu0 %v390
    %601 = vmatprep.subr.mxu0 0.0
    %602 = vmatpush1.msra.mxu0 %v391
    %603 = vmatprep.subr.mxu0 0.0
    %604 = vmatpush1.msra.mxu0 %v392
    %605 = vmatprep.subr.mxu0 0.0
    %606 = vmatpush1.msra.mxu0 %v393
    %607 = vmatprep.subr.mxu0 0.0
    %608 = vmatpush1.msra.mxu0 %v394
    %609 = vmatprep.subr.mxu0 0.0
    %610 = vmatpush1.msra.mxu0 %v395
    %611 = vmatprep.subr.mxu0 0.0
    %612 = vmatpush1.msra.mxu0 %v396
    %613 = vmatprep.subr.mxu0 0.0
    %614 = vmatpush1.msra.mxu0 %v397
    %615 = vmatprep.subr.mxu0 0.0
    %616 = vmatpush1.msra.mxu0 %v398
    %617 = vmatprep.subr.mxu0 0.0
    %618 = vmatpush1.msra.mxu0 %v399
    %619 = vmatprep.mubr.f32.mxu0 %v290
    %620 = vmatmul.mubr.f32.gmra.mrb[0].mxu0 %v284
    %v621 = vpop.f32.mrb[0].mxu0
    %v622 = vadd.f32 %v547, %v621
    %v623 = vpop.f32.mrb[0].mxu0
    %624 = vmatprep.mubr.f32.mxu0 %v291
    %625 = vmatmul.mubr.f32.gmra.mrb[0].mxu0 %v285
    %v626 = vpop.f32.mrb[0].mxu0
    %v627 = vadd.f32 %v552, %v626
    %v628 = vpop.f32.mrb[0].mxu0
    %629 = vdwg.mxu0
    %630 = vmatprep.subr.mxu0 0.0
    %631 = vmatpush1.msra.mxu0 %v400
    %632 = vmatprep.subr.mxu0 0.0
    %633 = vmatpush1.msra.mxu0 %v401
    %634 = vmatprep.subr.mxu0 0.0
    %635 = vmatpush1.msra.mxu0 %v402
    %636 = vmatprep.subr.mxu0 0.0
    %637 = vmatpush1.msra.mxu0 %v403
    %638 = vmatprep.subr.mxu0 0.0
    %639 = vmatpush1.msra.mxu0 %v404
    %640 = vmatprep.subr.mxu0 0.0
    %641 = vmatpush1.msra.mxu0 %v405
    %642 = vmatprep.subr.mxu0 0.0
    %643 = vmatpush1.msra.mxu0 %v406
    %644 = vmatprep.subr.mxu0 0.0
    %645 = vmatpush1.msra.mxu0 %v407
    %646 = vmatprep.subr.mxu0 0.0
    %647 = vmatpush1.msra.mxu0 %v408
    %648 = vmatprep.subr.mxu0 0.0
    %649 = vmatpush1.msra.mxu0 %v409
    %650 = vmatprep.subr.mxu0 0.0
    %651 = vmatpush1.msra.mxu0 %v410
    %652 = vmatprep.subr.mxu0 0.0
    %653 = vmatpush1.msra.mxu0 %v411
    %654 = vmatprep.subr.mxu0 0.0
    %655 = vmatpush1.msra.mxu0 %v412
    %656 = vmatprep.subr.mxu0 0.0
    %657 = vmatpush1.msra.mxu0 %v413
    %658 = vmatprep.subr.mxu0 0.0
    %659 = vmatpush1.msra.mxu0 %v414
    %660 = vmatprep.subr.mxu0 0.0
    %661 = vmatpush1.msra.mxu0 %v415
    %662 = vmatprep.subr.mxu0 0.0
    %663 = vmatpush1.msra.mxu0 %v416
    %664 = vmatprep.subr.mxu0 0.0
    %665 = vmatpush1.msra.mxu0 %v417
    %666 = vmatprep.subr.mxu0 0.0
    %667 = vmatpush1.msra.mxu0 %v418
    %668 = vmatprep.subr.mxu0 0.0
    %669 = vmatpush1.msra.mxu0 %v419
    %670 = vmatprep.subr.mxu0 0.0
    %671 = vmatpush1.msra.mxu0 %v420
    %672 = vmatprep.subr.mxu0 0.0
    %673 = vmatpush1.msra.mxu0 %v421
    %674 = vmatprep.subr.mxu0 0.0
    %675 = vmatpush1.msra.mxu0 %v422
    %676 = vmatprep.subr.mxu0 0.0
    %677 = vmatpush1.msra.mxu0 %v423
    %678 = vmatprep.subr.mxu0 0.0
    %679 = vmatpush1.msra.mxu0 %v424
    %680 = vmatprep.subr.mxu0 0.0
    %681 = vmatpush1.msra.mxu0 %v425
    %682 = vmatprep.subr.mxu0 0.0
    %683 = vmatpush1.msra.mxu0 %v426
    %684 = vmatprep.subr.mxu0 0.0
    %685 = vmatpush1.msra.mxu0 %v427
    %686 = vmatprep.subr.mxu0 0.0
    %687 = vmatpush1.msra.mxu0 %v428
    %688 = vmatprep.subr.mxu0 0.0
    %689 = vmatpush1.msra.mxu0 %v429
    %690 = vmatprep.subr.mxu0 0.0
    %691 = vmatpush1.msra.mxu0 %v430
    %692 = vmatprep.subr.mxu0 0.0
    %693 = vmatpush1.msra.mxu0 %v431
    %694 = vmatprep.mubr.f32.mxu0 %v302
    %695 = vmatmul.mubr.f32.gmra.mrb[0].mxu0 %v296
    %v696 = vpop.f32.mrb[0].mxu0
    %v697 = vadd.f32 %v622, %v696
    %v698 = vpop.f32.mrb[0].mxu0
    %699 = vmatprep.mubr.f32.mxu0 %v303
    %700 = vmatmul.mubr.f32.gmra.mrb[0].mxu0 %v297
    %v701 = vpop.f32.mrb[0].mxu0
    %v702 = vadd.f32 %v627, %v701
    %v703 = vpop.f32.mrb[0].mxu0
    %704 = vdwg.mxu0
    %705 = vmatprep.subr.mxu0 0.0
    %706 = vmatpush1.msra.mxu0 %v432
    %707 = vmatprep.subr.mxu0 0.0
    %708 = vmatpush1.msra.mxu0 %v433
    %709 = vmatprep.subr.mxu0 0.0
    %710 = vmatpush1.msra.mxu0 %v434
    %711 = vmatprep.subr.mxu0 0.0
    %712 = vmatpush1.msra.mxu0 %v435
    %713 = vmatprep.subr.mxu0 0.0
    %714 = vmatpush1.msra.mxu0 %v436
    %715 = vmatprep.subr.mxu0 0.0
    %716 = vmatpush1.msra.mxu0 %v437
    %717 = vmatprep.subr.mxu0 0.0
    %718 = vmatpush1.msra.mxu0 %v438
    %719 = vmatprep.subr.mxu0 0.0
    %720 = vmatpush1.msra.mxu0 %v439
    %721 = vmatprep.subr.mxu0 0.0
    %722 = vmatpush1.msra.mxu0 %v440
    %723 = vmatprep.subr.mxu0 0.0
    %724 = vmatpush1.msra.mxu0 %v441
    %725 = vmatprep.subr.mxu0 0.0
    %726 = vmatpush1.msra.mxu0 %v442
    %727 = vmatprep.subr.mxu0 0.0
    %728 = vmatpush1.msra.mxu0 %v443
    %729 = vmatprep.subr.mxu0 0.0
    %730 = vmatpush1.msra.mxu0 %v444
    %731 = vmatprep.subr.mxu0 0.0
    %732 = vmatpush1.msra.mxu0 %v445
    %733 = vmatprep.subr.mxu0 0.0
    %734 = vmatpush1.msra.mxu0 %v446
    %735 = vmatprep.subr.mxu0 0.0
    %736 = vmatpush1.msra.mxu0 %v447
    %737 = vmatprep.subr.mxu0 0.0
    %738 = vmatpush1.msra.mxu0 %v448
    %739 = vmatprep.subr.mxu0 0.0
    %740 = vmatpush1.msra.mxu0 %v449
    %741 = vmatprep.subr.mxu0 0.0
    %742 = vmatpush1.msra.mxu0 %v450
    %743 = vmatprep.subr.mxu0 0.0
    %744 = vmatpush1.msra.mxu0 %v451
    %745 = vmatprep.subr.mxu0 0.0
    %746 = vmatpush1.msra.mxu0 %v452
    %747 = vmatprep.subr.mxu0 0.0
    %748 = vmatpush1.msra.mxu0 %v453
    %749 = vmatprep.subr.mxu0 0.0
    %750 = vmatpush1.msra.mxu0 %v454
    %751 = vmatprep.subr.mxu0 0.0
    %752 = vmatpush1.msra.mxu0 %v455
    %753 = vmatprep.subr.mxu0 0.0
    %754 = vmatpush1.msra.mxu0 %v456
    %755 = vmatprep.subr.mxu0 0.0
    %756 = vmatpush1.msra.mxu0 %v457
    %757 = vmatprep.subr.mxu0 0.0
    %758 = vmatpush1.msra.mxu0 %v458
    %759 = vmatprep.subr.mxu0 0.0
    %760 = vmatpush1.msra.mxu0 %v459
    %761 = vmatprep.subr.mxu0 0.0
    %762 = vmatpush1.msra.mxu0 %v460
    %763 = vmatprep.subr.mxu0 0.0
    %764 = vmatpush1.msra.mxu0 %v461
    %765 = vmatprep.subr.mxu0 0.0
    %766 = vmatpush1.msra.mxu0 %v462
    %767 = vmatprep.subr.mxu0 0.0
    %768 = vmatpush1.msra.mxu0 %v463
    %769 = vmatprep.mubr.f32.mxu0 %v314
    %770 = vmatmul.mubr.f32.gmra.mrb[0].mxu0 %v308
    %v771 = vpop.f32.mrb[0].mxu0
    %v772 = vadd.f32 %v697, %v771
    %v773 = vpop.f32.mrb[0].mxu0
    %774 = vmatprep.mubr.f32.mxu0 %v315
    %775 = vmatmul.mubr.f32.gmra.mrb[0].mxu0 %v309
    %v776 = vpop.f32.mrb[0].mxu0
    %v777 = vadd.f32 %v702, %v776
    %v778 = vpop.f32.mrb[0].mxu0
    %779 = vdwg.mxu0
    %780 = vmatprep.subr.mxu0 0.0
    %781 = vmatpush1.msra.mxu0 %v464
    %782 = vmatprep.subr.mxu0 0.0
    %783 = vmatpush1.msra.mxu0 %v465
    %784 = vmatprep.subr.mxu0 0.0
    %785 = vmatpush1.msra.mxu0 %v466
    %786 = vmatprep.subr.mxu0 0.0
    %787 = vmatpush1.msra.mxu0 %v467
    %788 = vmatprep.subr.mxu0 0.0
    %789 = vmatpush1.msra.mxu0 %v468
    %790 = vmatprep.subr.mxu0 0.0
    %791 = vmatpush1.msra.mxu0 %v469
    %792 = vmatprep.subr.mxu0 0.0
    %793 = vmatpush1.msra.mxu0 %v470
    %794 = vmatprep.subr.mxu0 0.0
    %795 = vmatpush1.msra.mxu0 %v471
    %796 = vmatprep.subr.mxu0 0.0
    %797 = vmatpush1.msra.mxu0 %v472
    %798 = vmatprep.subr.mxu0 0.0
    %799 = vmatpush1.msra.mxu0 %v473
    %800 = vmatprep.subr.mxu0 0.0
    %801 = vmatpush1.msra.mxu0 %v474
    %802 = vmatprep.subr.mxu0 0.0
    %803 = vmatpush1.msra.mxu0 %v475
    %804 = vmatprep.subr.mxu0 0.0
    %805 = vmatpush1.msra.mxu0 %v476
    %806 = vmatprep.subr.mxu0 0.0
    %807 = vmatpush1.msra.mxu0 %v477
    %808 = vmatprep.subr.mxu0 0.0
    %809 = vmatpush1.msra.mxu0 %v478
    %810 = vmatprep.subr.mxu0 0.0
    %811 = vmatpush1.msra.mxu0 %v479
    %812 = vmatprep.subr.mxu0 0.0
    %813 = vmatpush1.msra.mxu0 0.0
    %814 = vmatprep.subr.mxu0 0.0
    %815 = vmatpush1.msra.mxu0 0.0
    %816 = vmatprep.subr.mxu0 0.0
    %817 = vmatpush1.msra.mxu0 0.0
    %818 = vmatprep.subr.mxu0 0.0
    %819 = vmatpush1.msra.mxu0 0.0
    %820 = vmatprep.subr.mxu0 0.0
    %821 = vmatpush1.msra.mxu0 0.0
    %822 = vmatprep.subr.mxu0 0.0
    %823 = vmatpush1.msra.mxu0 0.0
    %824 = vmatprep.subr.mxu0 0.0
    %825 = vmatpush1.msra.mxu0 0.0
    %826 = vmatprep.subr.mxu0 0.0
    %827 = vmatpush1.msra.mxu0 0.0
    %828 = vmatprep.subr.mxu0 0.0
    %829 = vmatpush1.msra.mxu0 0.0
    %830 = vmatprep.subr.mxu0 0.0
    %831 = vmatpush1.msra.mxu0 0.0
    %832 = vmatprep.subr.mxu0 0.0
    %833 = vmatpush1.msra.mxu0 0.0
    %834 = vmatprep.subr.mxu0 0.0
    %835 = vmatpush1.msra.mxu0 0.0
    %836 = vmatprep.subr.mxu0 0.0
    %837 = vmatpush1.msra.mxu0 0.0
    %838 = vmatprep.subr.mxu0 0.0
    %839 = vmatpush1.msra.mxu0 0.0
    %840 = vmatprep.subr.mxu0 0.0
    %841 = vmatpush1.msra.mxu0 0.0
    %842 = vmatprep.subr.mxu0 0.0
    %843 = vmatpush1.msra.mxu0 0.0
    %844 = vmatprep.mubr.f32.mxu0 0.0
    %845 = vmatmul.mubr.f32.gmra.mrb[0].mxu0 %v320
    %v846 = vpop.f32.mrb[0].mxu0
    %v847 = vadd.f32 %v772, %v846
    %v848 = vpop.f32.mrb[0].mxu0
    %849 = vmatprep.mubr.f32.mxu0 0.0
    %850 = vmatmul.mubr.f32.gmra.mrb[0].mxu0 %v321
    %v851 = vpop.f32.mrb[0].mxu0
    %v852 = vadd.f32 %v777, %v851
    %v853 = vpop.f32.mrb[0].mxu0
    %854 = vdwg.mxu0
    %855 = vst [vmem:[#allocation7] sm:$0xff] %v847
    %856 = vst [vmem:[#allocation7 + $0x8] sm:$0xff] %v852
    // Predicated region
    $region18: #{tpu_custom_call.1} parent=1 // pred_check
      _
    $region19: #{tpu_custom_call.1} parent=1 // pred_check_branch
      %858 = sbr.rel (0) target = $region21
    $region20: #{tpu_custom_call.1} parent=1 // pred_region
      %s860 = ssub.s32 256, 256
      %861 = vsyncadd [#allocation4], %s860
      %s862 = sshll.u32 [#allocation7], 4
      %s863 = int_to_ptr.vmem [resolvable:$true] %s862
      %868 = dma.vmem_to_hbm [thread:$0]  %s863, 256, %s2, [#allocation4], 128, 128, 8
    $region21: #{tpu_custom_call.1} parent=1 // pred_fallthru
      _
    // Predicated region
    $region22: #{tpu_custom_call.1} parent=1 // pred_check
      _
    $region23: #{tpu_custom_call.1} parent=1 // pred_check_branch
      %870 = sbr.rel (0) target = $region25
    $region24: #{tpu_custom_call.1} parent=1 // pred_region
      %871 = dma.done [#allocation4], 256
    $region25: #{tpu_custom_call.1} parent=1 // pred_fallthru
      _
    %872 = vsyncpa [#allocation3], 1
    %873 = vsyncpa [#allocation6], 1
    %874 = vsyncpa [#allocation4], 1

</llo_original>
